<compile_context>
chip_gen: v6e
topology: v6e:2x2x1
jax: 0.10.0
libtpu: 0.0.40
codegen_flags: <defaults>
</compile_context>

<pallas_src>
import functools
import math

import jax
import jax.numpy as jnp
from jax.experimental import pallas as pl
from jax.experimental.pallas import tpu as pltpu


def _erf(z):
    # Abramowitz & Stegun 7.1.26 polynomial approximation of erf
    # (max abs error ~1.5e-7). Elementwise-only ops -> always lowerable.
    a1, a2, a3, a4, a5 = (0.254829592, -0.284496736, 1.421413741,
                          -1.453152027, 1.061405429)
    p = 0.3275911
    a = jnp.abs(z)
    t = 1.0 / (1.0 + p * a)
    poly = ((((a5 * t + a4) * t + a3) * t + a2) * t + a1) * t
    y = 1.0 - poly * jnp.exp(-a * a)
    return jnp.where(z >= 0, y, -y)


def _gelu_exact(x):
    # erf-based GELU, matching torch.nn.functional.gelu (ACT2FN["gelu"]).
    return 0.5 * x * (1.0 + _erf(x * (1.0 / math.sqrt(2.0))))


def _bert_intermediate_kernel(x_ref, w_ref, b_ref, o_ref):
    # x_ref: (tm, D)   compute-dtype (bf16) activations
    # w_ref: (D, tn)   compute-dtype weight tile (pre-transposed to (in, out))
    # b_ref: (1, tn)   f32 bias tile
    # o_ref: (tm, tn)  output tile (input dtype), lane-dense last dim
    acc = jnp.dot(x_ref[...], w_ref[...],
                  preferred_element_type=jnp.float32)        # MXU, f32 accum
    h = acc + b_ref[...].astype(jnp.float32)                  # f32 epilogue
    o_ref[...] = _gelu_exact(h).astype(o_ref.dtype)


def _choose_tile(total, preferred):
    for t in preferred:
        if t <= total and total % t == 0:
            return t
    return total  # the full dimension is always a legal block size


def bert_intermediate(hidden_states, weight, bias, *,
                      compute_dtype=jnp.bfloat16, tm=None, tn=None):
    """BertIntermediate forward.

    hidden_states: (..., D) activations.
    weight:        (I, D)   nn.Linear weight (out_features, in_features).
    bias:          (I,)     nn.Linear bias.
    """
    orig_shape = hidden_states.shape
    D = orig_shape[-1]
    I = weight.shape[0]

    x2d = hidden_states.reshape(-1, D)
    M = x2d.shape[0]

    if tm is None:
        tm = _choose_tile(M, (512, 256, 128, 64, 32, 16, 8))
    if tn is None:
        tn = _choose_tile(I, (512, 256, 128))

    # bf16 MXU operands (f32 accumulation inside the kernel); bias stays f32.
    x_c = x2d.astype(compute_dtype)
    w_c = jnp.transpose(weight).astype(compute_dtype)   # (D, I)
    b_c = bias.reshape(1, I).astype(jnp.float32)

    grid = (I // tn, M // tm)   # intermediate tiles outer -> weight tile resident

    out2d = pl.pallas_call(
        _bert_intermediate_kernel,
        out_shape=jax.ShapeDtypeStruct((M, I), hidden_states.dtype),
        grid_spec=pltpu.PrefetchScalarGridSpec(
            num_scalar_prefetch=0,
            grid=grid,
            in_specs=[
                pl.BlockSpec((tm, D), lambda j, i: (i, 0)),   # activations
                pl.BlockSpec((D, tn), lambda j, i: (0, j)),   # weight tile
                pl.BlockSpec((1, tn), lambda j, i: (0, j)),   # bias tile
            ],
            out_specs=pl.BlockSpec((tm, tn), lambda j, i: (i, j)),
        ),
        compiler_params=pltpu.CompilerParams(
            dimension_semantics=("parallel", "parallel")),
    )(x_c, w_c, b_c)

    return out2d.reshape(*orig_shape[:-1], I)


def _reference(hidden_states, weight, bias):
    # Plain-JAX f32 reference mirroring the PyTorch forward (eval mode).
    h = hidden_states @ weight.T + bias
    return jax.nn.gelu(h, approximate=False)


if __name__ == "__main__":
    # Small config: batch=2, seq=8, hidden=32, intermediate=4*hidden=128.
    B, S, D = 2, 8, 32
    I = 4 * D

    key = jax.random.PRNGKey(0)
    k0, k1, k2 = jax.random.split(key, 3)

    hidden_states = jax.random.normal(k0, (B, S, D), jnp.float32)
    weight = 0.05 * jax.random.normal(k1, (I, D), jnp.float32)  # (out, in)
    bias = 0.05 * jax.random.normal(k2, (I,), jnp.float32)

    out = bert_intermediate(hidden_states, weight, bias)
    out = jax.block_until_ready(out)

    ref = _reference(hidden_states, weight, bias)
    assert out.shape == (B, S, I)
    max_err = float(jnp.max(jnp.abs(out - ref)))
    # bf16 MXU operands vs f32 reference -> allow ~1e-2 absolute tolerance.
    assert jnp.allclose(out, ref, atol=2e-2, rtol=2e-2), (
        f"mismatch vs. reference (max abs err {max_err:.3e})")

    print("KERNEL_OK")
</pallas_src>

<mosaic_0001>
module attributes {stable_mosaic.version = 11 : i64} {
  func.func @_bert_intermediate_kernel(%arg0: i32, %arg1: i32, %arg2: memref<16x32xbf16, #tpu.memory_space<vmem>>, %arg3: memref<32x128xbf16, #tpu.memory_space<vmem>>, %arg4: memref<1x128xf32, #tpu.memory_space<vmem>>, %arg5: memref<16x128xf32, #tpu.memory_space<vmem>>) attributes {dimension_semantics = [#tpu.dimension_semantics<parallel>, #tpu.dimension_semantics<parallel>], iteration_bounds = array<i64: 1, 1>, scalar_prefetch = 0 : i64, scratch_operands = 0 : i64, tpu.core_type = #tpu.core_type<tc>, window_params = [{transform_indices = @transform_0, window_bounds = array<i64: 16, 32>}, {transform_indices = @transform_1, window_bounds = array<i64: 32, 128>}, {transform_indices = @transform_2, window_bounds = array<i64: 1, 128>}, {transform_indices = @transform_3, window_bounds = array<i64: 16, 128>}]} {
    %c0 = arith.constant 0 : index
    %c0_0 = arith.constant 0 : index
    %0 = vector.load %arg2[%c0, %c0_0] : memref<16x32xbf16, #tpu.memory_space<vmem>>, vector<16x32xbf16>
    %c0_1 = arith.constant 0 : index
    %c0_2 = arith.constant 0 : index
    %1 = vector.load %arg3[%c0_1, %c0_2] : memref<32x128xbf16, #tpu.memory_space<vmem>>, vector<32x128xbf16>
    %cst = arith.constant dense<0.000000e+00> : vector<16x128xf32>
    %2 = tpu.matmul %0, %1, %cst {dimension_numbers = #tpu.dot_dimension_numbers<[1], [0], [0], [1], [0, 0, 1, 1], [], []>} : vector<16x32xbf16>, vector<32x128xbf16>, vector<16x128xf32> -> vector<16x128xf32>
    %c0_3 = arith.constant 0 : index
    %c0_4 = arith.constant 0 : index
    %3 = vector.load %arg4[%c0_3, %c0_4] : memref<1x128xf32, #tpu.memory_space<vmem>>, vector<1x128xf32>
    %4 = vector.broadcast %3 : vector<1x128xf32> to vector<16x128xf32>
    %5 = arith.addf %2, %4 : vector<16x128xf32>
    %cst_5 = arith.constant 5.000000e-01 : f32
    %6 = vector.broadcast %cst_5 : f32 to vector<16x128xf32>
    %7 = arith.mulf %6, %5 : vector<16x128xf32>
    %cst_6 = arith.constant 0.707106769 : f32
    %8 = vector.broadcast %cst_6 : f32 to vector<16x128xf32>
    %9 = arith.mulf %5, %8 : vector<16x128xf32>
    %10 = math.absf %9 : vector<16x128xf32>
    %cst_7 = arith.constant 0.327591091 : f32
    %11 = vector.broadcast %cst_7 : f32 to vector<16x128xf32>
    %12 = arith.mulf %11, %10 : vector<16x128xf32>
    %cst_8 = arith.constant 1.000000e+00 : f32
    %13 = vector.broadcast %cst_8 : f32 to vector<16x128xf32>
    %14 = arith.addf %13, %12 : vector<16x128xf32>
    %cst_9 = arith.constant 1.000000e+00 : f32
    %15 = vector.broadcast %cst_9 : f32 to vector<16x128xf32>
    %16 = arith.divf %15, %14 : vector<16x128xf32>
    %cst_10 = arith.constant 1.06140542 : f32
    %17 = vector.broadcast %cst_10 : f32 to vector<16x128xf32>
    %18 = arith.mulf %17, %16 : vector<16x128xf32>
    %cst_11 = arith.constant -1.45315206 : f32
    %19 = vector.broadcast %cst_11 : f32 to vector<16x128xf32>
    %20 = arith.addf %18, %19 : vector<16x128xf32>
    %21 = arith.mulf %20, %16 : vector<16x128xf32>
    %cst_12 = arith.constant 1.42141378 : f32
    %22 = vector.broadcast %cst_12 : f32 to vector<16x128xf32>
    %23 = arith.addf %21, %22 : vector<16x128xf32>
    %24 = arith.mulf %23, %16 : vector<16x128xf32>
    %cst_13 = arith.constant -0.284496725 : f32
    %25 = vector.broadcast %cst_13 : f32 to vector<16x128xf32>
    %26 = arith.addf %24, %25 : vector<16x128xf32>
    %27 = arith.mulf %26, %16 : vector<16x128xf32>
    %cst_14 = arith.constant 0.254829586 : f32
    %28 = vector.broadcast %cst_14 : f32 to vector<16x128xf32>
    %29 = arith.addf %27, %28 : vector<16x128xf32>
    %30 = arith.mulf %29, %16 : vector<16x128xf32>
    %cst_15 = arith.constant 0.000000e+00 : f32
    %31 = vector.broadcast %cst_15 : f32 to vector<16x128xf32>
    %32 = arith.subf %31, %10 : vector<16x128xf32>
    %33 = arith.mulf %32, %10 : vector<16x128xf32>
    %34 = math.exp %33 : vector<16x128xf32>
    %35 = arith.mulf %30, %34 : vector<16x128xf32>
    %cst_16 = arith.constant 1.000000e+00 : f32
    %36 = vector.broadcast %cst_16 : f32 to vector<16x128xf32>
    %37 = arith.subf %36, %35 : vector<16x128xf32>
    %cst_17 = arith.constant 0.000000e+00 : f32
    %38 = vector.broadcast %cst_17 : f32 to vector<16x128xf32>
    %39 = arith.cmpf oge, %9, %38 : vector<16x128xf32>
    %cst_18 = arith.constant 0.000000e+00 : f32
    %40 = vector.broadcast %cst_18 : f32 to vector<16x128xf32>
    %41 = arith.subf %40, %37 : vector<16x128xf32>
    %42 = arith.select %39, %37, %41 : vector<16x128xi1>, vector<16x128xf32>
    %cst_19 = arith.constant 1.000000e+00 : f32
    %43 = vector.broadcast %cst_19 : f32 to vector<16x128xf32>
    %44 = arith.addf %43, %42 : vector<16x128xf32>
    %45 = arith.mulf %7, %44 : vector<16x128xf32>
    %c0_20 = arith.constant 0 : index
    %c0_21 = arith.constant 0 : index
    %46 = vector.load %arg5[%c0_20, %c0_21] : memref<16x128xf32, #tpu.memory_space<vmem>>, vector<16x128xf32>
    tpu.vector_store %arg5[%c0_20, %c0_21], %45 {strides = array<i32>} : memref<16x128xf32, #tpu.memory_space<vmem>>, vector<16x128xf32>,
    return
  }
  func.func @transform_0(%arg0: i32, %arg1: i32) -> (i32, i32) {
    %c0_i32 = arith.constant 0 : i32
    %c0_i32_0 = arith.constant 0 : i32
    return %arg1, %c0_i32 : i32, i32
  }
  func.func @transform_1(%arg0: i32, %arg1: i32) -> (i32, i32) {
    %c0_i32 = arith.constant 0 : i32
    %c0_i32_0 = arith.constant 0 : i32
    return %c0_i32, %arg0 : i32, i32
  }
  func.func @transform_2(%arg0: i32, %arg1: i32) -> (i32, i32) {
    %c0_i32 = arith.constant 0 : i32
    %c0_i32_0 = arith.constant 0 : i32
    return %c0_i32, %arg0 : i32, i32
  }
  func.func @transform_3(%arg0: i32, %arg1: i32) -> (i32, i32) {
    %c0_i32 = arith.constant 0 : i32
    return %arg1, %arg0 : i32, i32
  }
}

</mosaic_0001>

<llo_original>
// kernel: tpu_custom_call.1
$region0: #{tpu_custom_call.1}
  #allocation0 [shape = 'u32[]', space=smem, size = 0x4, offset = 0x4, fixed_abs, tag = 'smem constant byte address 0x4 - core index']
  #allocation1 [shape = 'u32[144,128]{1,0:T(1,128)}', space=vmem, size = 0x12000, scoped, tag = 'internal scratch']
  %s0 = inlined_call_operand.hbm [shape: bf16[16,32], index: 0, kind: input, shape index: {}]
  %s1 = inlined_call_operand.hbm [shape: bf16[32,128], index: 1, kind: input, shape index: {}]
  %s2 = inlined_call_operand.vmem [shape: f32[1,128], index: 2, kind: input, shape index: {}]
  %s3 = inlined_call_operand.hbm [shape: f32[16,128], index: 3, kind: output, shape index: {}]
  %s4 = sld [smem:[#allocation0]]
  $region30: #{tpu_custom_call.1} parent=0
    _
  %s6 = ssub.s32 1, %s4
  %s7 = scalar_select 0, %s6, %s4
  $region1: #{tpu_custom_call.1} parent=0
    #allocation2 [shape = 'u8[4096]{0}', space=vmem, size = 0x1000, scoped, tag = 'input window, operand 0, single buffered']
    #allocation3 [shape = 's32[1]{0}', space=sflag, size = 0x4, scoped, tag = 'scoped memory for tpu_custom_call.1']
    #allocation4 [shape = 's32[1]{0}', space=sflag, size = 0x4, scoped, tag = 'scoped memory for tpu_custom_call.1']
    #allocation5 [shape = 'u8[8192]{0}', space=vmem, size = 0x2000, scoped, tag = 'input window, operand 1, single buffered']
    #allocation6 [shape = 's32[1]{0}', space=sflag, size = 0x4, scoped, tag = 'scoped memory for tpu_custom_call.1']
    #allocation7 [shape = 'u8[8192]{0}', space=vmem, size = 0x2000, scoped, tag = 'output window, operand 0, single buffered']
    %8 = vsyncpa [#allocation3], 0
    %9 = vsyncpa [#allocation6], 0
    %10 = vsyncpa [#allocation4], 0
    // Predicated region
    $region2: #{tpu_custom_call.1} parent=1 // pred_check
      _
    $region3: #{tpu_custom_call.1} parent=1 // pred_check_branch
      %12 = sbr.rel (0) target = $region5
    $region4: #{tpu_custom_call.1} parent=1 // pred_region
      %s14 = ssub.s32 128, 128
      %15 = vsyncadd [#allocation3], %s14
      %s16 = sshll.u32 [#allocation2], 4
      %s17 = int_to_ptr.vmem [resolvable:$true] %s16
      %22 = dma.hbm_to_vmem [thread:$0]  %s0, 128, %s17, [#allocation3], 64, 64, 4
    $region5: #{tpu_custom_call.1} parent=1 // pred_fallthru
      _
    // Predicated region
    $region6: #{tpu_custom_call.1} parent=1 // pred_check
      _
    $region7: #{tpu_custom_call.1} parent=1 // pred_check_branch
      %24 = sbr.rel (0) target = $region9
    $region8: #{tpu_custom_call.1} parent=1 // pred_region
      %s26 = ssub.s32 256, 256
      %27 = vsyncadd [#allocation6], %s26
      %s28 = sshll.u32 [#allocation5], 4
      %s29 = int_to_ptr.vmem [resolvable:$true] %s28
      %34 = dma.hbm_to_vmem [thread:$0]  %s1, 256, %s29, [#allocation6], 64, 64, 4
    $region9: #{tpu_custom_call.1} parent=1 // pred_fallthru
      _
    // Predicated region
    $region10: #{tpu_custom_call.1} parent=1 // pred_check
      _
    $region11: #{tpu_custom_call.1} parent=1 // pred_check_branch
      %36 = sbr.rel (0) target = $region13
    $region12: #{tpu_custom_call.1} parent=1 // pred_region
      _
    $region13: #{tpu_custom_call.1} parent=1 // pred_fallthru
      _
    // Predicated region
    $region14: #{tpu_custom_call.1} parent=1 // pred_check
      _
    $region15: #{tpu_custom_call.1} parent=1 // pred_check_branch
      %38 = sbr.rel (0) target = $region17
    $region16: #{tpu_custom_call.1} parent=1 // pred_region
      %39 = dma.done [#allocation3], 128
    $region17: #{tpu_custom_call.1} parent=1 // pred_fallthru
      _
    // Predicated region
    $region18: #{tpu_custom_call.1} parent=1 // pred_check
      _
    $region19: #{tpu_custom_call.1} parent=1 // pred_check_branch
      %41 = sbr.rel (0) target = $region21
    $region20: #{tpu_custom_call.1} parent=1 // pred_region
      %42 = dma.done [#allocation6], 256
    $region21: #{tpu_custom_call.1} parent=1 // pred_fallthru
      _
    %v44 = vld [vmem:[#allocation2] sm:$0xf]
    %v45 = vld [vmem:[#allocation2 + $0x4] sm:$0xf]
    %v46 = vld [vmem:[#allocation5] sm:$0xf]
    %v47 = vld [vmem:[#allocation5 + $0x4] sm:$0xf]
    %v48 = vld [vmem:[#allocation5 + $0x8] sm:$0xf]
    %v49 = vld [vmem:[#allocation5 + $0xc] sm:$0xf]
    %v50 = vld [vmem:[%s2] sm:$0x1]
    %v52 = vlaneseq
    %v53 = vshrl.u32 %v52, 7
    %v54 = vsub.s32 0, %v53
    %v55 = vrot.slane %v50, %v54
    %v59 = vunpack.c.l.b16 %v44
    %v60 = vunpack.c.l.b16 %v45
    %v61 = vpack.c.b16 %v60, %v59
    %v66 = vunpack.c.l.b16 %v46
    %v67 = vunpack.c.l.b16 %v47
    %v68 = vunpack.c.l.b16 %v48
    %v69 = vunpack.c.l.b16 %v49
    %v70 = vpack.c.b16 %v67, %v66
    %v71 = vpack.c.b16 %v69, %v68
    %vm74 = vcmask 261120
    %v76 = vsel %vm74, %v61, 0
    %78 = vmatprep.subr.bf16.mxu0 0
    %79 = vmatpush1.bf16.msra.mxu0 0
    %80 = vmatprep.subr.bf16.mxu0 0
    %81 = vmatpush1.bf16.msra.mxu0 0
    %82 = vmatprep.subr.bf16.mxu0 0
    %83 = vmatpush1.bf16.msra.mxu0 0
    %84 = vmatprep.subr.bf16.mxu0 0
    %85 = vmatpush1.bf16.msra.mxu0 0
    %86 = vmatprep.subr.bf16.mxu0 0
    %87 = vmatpush1.bf16.msra.mxu0 0
    %88 = vmatprep.subr.bf16.mxu0 0
    %89 = vmatpush1.bf16.msra.mxu0 0
    %90 = vmatprep.subr.bf16.mxu0 0
    %91 = vmatpush1.bf16.msra.mxu0 %v71
    %92 = vmatprep.subr.bf16.mxu0 0
    %93 = vmatpush1.bf16.msra.mxu0 %v70
    %94 = vmatprep.subr.bf16.mxu0 0
    %95 = vmatpush2.bf16.msra.mxu0 0
    %96 = vmatprep.subr.bf16.mxu0 0
    %97 = vmatpush2.bf16.msra.mxu0 0
    %98 = vmatprep.subr.bf16.mxu0 0
    %99 = vmatpush2.bf16.msra.mxu0 0
    %100 = vmatprep.subr.bf16.mxu0 0
    %101 = vmatpush2.bf16.msra.mxu0 0
    %102 = vmatprep.subr.bf16.mxu0 0
    %103 = vmatpush2.bf16.msra.mxu0 0
    %104 = vmatprep.subr.bf16.mxu0 0
    %105 = vmatpush2.bf16.msra.mxu0 0
    %106 = vmatprep.subr.bf16.mxu0 0
    %107 = vmatpush2.bf16.msra.mxu0 0
    %108 = vmatprep.subr.bf16.mxu0 0
    %109 = vmatpush2.bf16.msra.mxu0 0
    %110 = vmatprep.mubr.bf16.mxu0 0
    %111 = vmatmul.mubr.bf16.gmra.mxu0 %v76
    %v112 = vpop.f32.mrf.mxu0
    %v113 = vadd.f32 %v55, %v112
    %v114 = vpop.f32.mrf.mxu0
    %v115 = vpop.f32.mrf.mxu0
    %v116 = vadd.f32 %v55, %v115
    %v117 = vpop.f32.mrf.mxu0
    %118 = vdwg.mxu0
    %v119 = vmul.f32 %v113, 0.5
    %v120 = vmul.f32 %v116, 0.5
    %v121 = vmul.f32 %v113, 0.70710677
    %v122 = vmul.f32 %v116, 0.70710677
    %v123 = vand.u32 2147483647, %v121
    %v124 = vand.u32 2147483647, %v122
    %v125 = vmul.f32 %v123, 0.3275911
    %v126 = vmul.f32 %v124, 0.3275911
    %v127 = vadd.f32 %v125, 1.0
    %v128 = vadd.f32 %v126, 1.0
    %v129 = vrcp.pop %v127
    %v130 = vmul.f32 1.0, %v129
    %v131 = vrcp.pop %v128
    %v132 = vmul.f32 1.0, %v131
    %v133 = vmul.f32 %v130, 1.0614054
    %v134 = vmul.f32 %v132, 1.0614054
    %v135 = vadd.f32 %v133, -1.4531521
    %v136 = vadd.f32 %v134, -1.4531521
    %v137 = vmul.f32 %v135, %v130
    %v138 = vmul.f32 %v136, %v132
    %v139 = vadd.f32 %v137, 1.4214138
    %v140 = vadd.f32 %v138, 1.4214138
    %v141 = vmul.f32 %v139, %v130
    %v142 = vmul.f32 %v140, %v132
    %v143 = vadd.f32 %v141, -0.28449672
    %v144 = vadd.f32 %v142, -0.28449672
    %v145 = vmul.f32 %v143, %v130
    %v146 = vmul.f32 %v144, %v132
    %v147 = vadd.f32 %v145, 0.2548296
    %v148 = vadd.f32 %v146, 0.2548296
    %v149 = vmul.f32 %v147, %v130
    %v150 = vmul.f32 %v148, %v132
    %v151 = vsub.f32 0.0, %v123
    %v152 = vsub.f32 0.0, %v124
    %v153 = vmul.f32 %v151, %v123
    %v154 = vmul.f32 %v152, %v124
    %v155 = vmul.f32 %v153, 1.442695
    %v156 = vpow.pop %v155
    %v157 = vmul.f32 %v154, 1.442695
    %v158 = vpow.pop %v157
    %v159 = vmul.f32 %v149, %v156
    %v160 = vmul.f32 %v150, %v158
    %v161 = vsub.f32 1.0, %v159
    %v162 = vsub.f32 1.0, %v160
    %vm163 = vcmp.ge.f32.partialorder %v121, 0.0
    %vm164 = vcmp.ge.f32.partialorder %v122, 0.0
    %v165 = vsub.f32 0.0, %v161
    %v166 = vsub.f32 0.0, %v162
    %v167 = vsel %vm163, %v161, %v165
    %v168 = vsel %vm164, %v162, %v166
    %v169 = vadd.f32 %v167, 1.0
    %v170 = vadd.f32 %v168, 1.0
    %v171 = vmul.f32 %v119, %v169
    %v172 = vmul.f32 %v120, %v170
    %173 = vst [vmem:[#allocation7] sm:$0xff] %v171
    %174 = vst [vmem:[#allocation7 + $0x8] sm:$0xff] %v172
    // Predicated region
    $region22: #{tpu_custom_call.1} parent=1 // pred_check
      _
    $region23: #{tpu_custom_call.1} parent=1 // pred_check_branch
      %176 = sbr.rel (0) target = $region25
    $region24: #{tpu_custom_call.1} parent=1 // pred_region
      %s178 = ssub.s32 256, 256
      %179 = vsyncadd [#allocation4], %s178
      %s180 = sshll.u32 [#allocation7], 4
      %s181 = int_to_ptr.vmem [resolvable:$true] %s180
      %186 = dma.vmem_to_hbm [thread:$0]  %s181, 256, %s3, [#allocation4], 128, 128, 8
    $region25: #{tpu_custom_call.1} parent=1 // pred_fallthru
      _
    // Predicated region
    $region26: #{tpu_custom_call.1} parent=1 // pred_check
      _
    $region27: #{tpu_custom_call.1} parent=1 // pred_check_branch
      %188 = sbr.rel (0) target = $region29
    $region28: #{tpu_custom_call.1} parent=1 // pred_region
      %189 = dma.done [#allocation4], 256
    $region29: #{tpu_custom_call.1} parent=1 // pred_fallthru
      _
    %190 = vsyncpa [#allocation3], 1
    %191 = vsyncpa [#allocation6], 1
    %192 = vsyncpa [#allocation4], 1

</llo_original>
